<compile_context>
chip_gen: v6e
topology: v6e:2x2x1
jax: 0.10.0
libtpu: 0.0.40
codegen_flags: <defaults>
</compile_context>

<pallas_src>
import functools

import jax
import jax.numpy as jnp
from jax import lax
from jax.experimental import pallas as pl
from jax.experimental.pallas import tpu as pltpu


def _round_up(x, m):
    return (x + m - 1) // m * m


# ----------------------------------------------------------------------------
# Kernel 1: similarities / softmax / per-column scores, gridded over img batch
# ----------------------------------------------------------------------------
def _sim_kernel(ilen_ref,                       # scalar prefetch (SMEM): (bs,) i32
                txt_ref, img_ref, tlen_ref,     # VMEM inputs
                sim_ref, scores_ref,            # VMEM outputs
                *, bs, tl, il, dp, min_val, mxu_bf16):
    """Grid step j: all text batches vs. image batch j."""
    j = pl.program_id(0)

    # --- L2 normalize (torch.nn.functional.normalize, eps=1e-12) -----------
    # inv = min(rsqrt(sum(x^2)), 1e12)  ==  1 / max(||x||, 1e-12)
    txt = txt_ref[...].astype(jnp.float32)                    # (bs, tl, dp)
    img = img_ref[...].astype(jnp.float32)                    # (il, dp)
    t_inv = jnp.minimum(lax.rsqrt(jnp.sum(txt * txt, axis=-1, keepdims=True)), 1e12)
    i_inv = jnp.minimum(lax.rsqrt(jnp.sum(img * img, axis=-1, keepdims=True)), 1e12)
    txt_n = txt * t_inv
    img_n = img * i_inv

    # --- similarity matmul on the MXU ---------------------------------------
    mxu_dtype = jnp.bfloat16 if mxu_bf16 else jnp.float32
    a = txt_n.reshape(bs * tl, dp).astype(mxu_dtype)
    b = img_n.astype(mxu_dtype)
    s = lax.dot_general(a, b, (((1,), (1,)), ((), ())),
                        preferred_element_type=jnp.float32)   # (bs*tl, il)
    s = s.reshape(bs, tl, il)

    # --- length masks from small broadcast iotas -----------------------------
    t_iota = lax.broadcasted_iota(jnp.int32, (1, tl, 1), 1)
    k_iota = lax.broadcasted_iota(jnp.int32, (1, 1, il), 2)
    tlen = tlen_ref[...].reshape(bs, 1, 1)                    # txt lens per txt batch
    mask_t = t_iota >= tlen                                   # (bs, tl, 1)
    mask_k = k_iota >= ilen_ref[j]                            # (1, 1, il), SMEM scalar

    # masked_fill(-inf) followed by exp() == exact 0 at masked entries
    e = jnp.exp(s)
    e = jnp.where(mask_t, 0.0, e)
    e = jnp.where(mask_k, 0.0, e)

    # softmax over txt tokens (axis=1); divide -> EUP reciprocal + multiply
    denom = jnp.sum(e, axis=1, keepdims=True)                 # (bs, 1, il)
    p = e * pl.reciprocal(denom + min_val, approx=True)       # (bs, tl, il)

    # sim_scores2[:, j, :, :] in the PyTorch layout, written directly
    sim_ref[...] = p

    # max over txt tokens, then sum over image tokens of this image batch
    vals = jnp.max(p, axis=1)                                 # (bs, il)
    scores_ref[...] = jnp.sum(vals, axis=1, keepdims=True)    # (bs, 1) -> scores^T[j]


# ----------------------------------------------------------------------------
# Kernel 2: ContrastiveLoss.get_loss_for_scores(...).mean()
# ----------------------------------------------------------------------------
def _loss_kernel(s_ref, loss_ref, *, bs, margin, min_val):
    # NOTE: the final scalar is invariant to transposing `scores`
    # (sum(loss_txt(S^T)) == sum(loss_img(S)) and vice versa), so the j-major
    # scores from the sim kernel are used without an extra transpose.
    s = s_ref[...]                                            # (bs, bs) f32
    r = lax.broadcasted_iota(jnp.int32, (bs, bs), 0)
    c = lax.broadcasted_iota(jnp.int32, (bs, bs), 1)
    eye = r == c
    diag = jnp.where(eye, s, 0.0)
    diag_col = jnp.sum(diag, axis=1, keepdims=True)           # (bs, 1): S[a, a]
    diag_row = jnp.sum(diag, axis=0, keepdims=True)           # (1, bs): S[b, b]
    lt = jnp.where(eye, 0.0, jnp.maximum(margin + s - diag_col, min_val))
    li = jnp.where(eye, 0.0, jnp.maximum(margin + s - diag_row, min_val))
    # mean(lt.mean(1) + li.mean(0)) == (sum(lt) + sum(li)) / bs^2
    total = (jnp.sum(jnp.sum(lt, axis=1, keepdims=True), axis=0, keepdims=True) +
             jnp.sum(jnp.sum(li, axis=1, keepdims=True), axis=0, keepdims=True))
    loss_ref[...] = total / float(bs * bs)


# ----------------------------------------------------------------------------
# Wrapper
# ----------------------------------------------------------------------------
def multi_object_contrastive_max_loss(img_embs, txt_embs, img_lens, txt_lens,
                                      margin=0.2, min_val=1e-8):
    """img_embs: (bs, il, D), txt_embs: (bs, tl, D), *_lens: (bs,) ints."""
    if img_embs.shape[-1] != txt_embs.shape[-1]:
        raise ValueError
    bs, il, d = img_embs.shape
    _, tl, _ = txt_embs.shape

    # Zero-pad the embedding dim to a lane-aligned multiple of 128.  This is
    # numerically free: zeros change neither the L2 norm nor the dot product.
    dp = _round_up(d, 128)
    if dp != d:
        txt_embs = jnp.pad(txt_embs, ((0, 0), (0, 0), (0, dp - d)))
        img_embs = jnp.pad(img_embs, ((0, 0), (0, 0), (0, dp - d)))

    tlen = txt_lens.astype(jnp.int32).reshape(bs, 1)   # tiny VMEM input
    ilen = img_lens.astype(jnp.int32)                  # scalar-prefetch -> SMEM
    mxu_bf16 = bool(txt_embs.dtype == jnp.bfloat16 and img_embs.dtype == jnp.bfloat16)
    emb_bytes = jnp.dtype(txt_embs.dtype).itemsize

    sim_kernel = functools.partial(
        _sim_kernel, bs=bs, tl=tl, il=il, dp=dp,
        min_val=float(min_val), mxu_bf16=mxu_bf16)

    grid_spec = pltpu.PrefetchScalarGridSpec(
        num_scalar_prefetch=1,
        grid=(bs,),                                            # one step per image batch j
        in_specs=[
            # text block: resident across the whole grid (constant index map)
            pl.BlockSpec((bs, tl, dp), lambda j, ilen_s: (0, 0, 0)),
            # image batch j only
            pl.BlockSpec((None, il, dp), lambda j, ilen_s: (j, 0, 0)),
            # txt lens (bs, 1) int32
            pl.BlockSpec((bs, 1), lambda j, ilen_s: (0, 0)),
        ],
        out_specs=(
            # sim_scores2 column j, directly in PyTorch (bs_txt, bs_img, tl, il) layout
            pl.BlockSpec((bs, None, tl, il), lambda j, ilen_s: (0, j, 0, 0)),
            # scores^T: row j holds scores[:, j]
            pl.BlockSpec((None, bs, 1), lambda j, ilen_s: (j, 0, 0)),
        ),
    )

    # Per-step block footprint (one copy of each block) + pipeline/scratch headroom.
    blk_bytes = ((bs * tl * dp + il * dp) * emb_bytes
                 + (bs * tl * il + bs) * 4 + bs * 4)
    vmem_limit = int(min(max(4 * blk_bytes + (8 << 20), 32 << 20), 64 << 20))

    cost = pl.CostEstimate(
        flops=int(2 * bs * bs * tl * il * dp),
        transcendentals=int(bs * bs * tl * il + bs * (bs * tl + il) + bs * bs * il),
        bytes_accessed=int((bs * tl * dp + bs * il * dp) * emb_bytes
                           + bs * bs * tl * il * 4 + bs * bs * 4),
    )

    sim, scores_t = pl.pallas_call(
        sim_kernel,
        grid_spec=grid_spec,
        out_shape=(jax.ShapeDtypeStruct((bs, bs, tl, il), jnp.float32),
                   jax.ShapeDtypeStruct((bs, bs, 1), jnp.float32)),
        compiler_params=pltpu.CompilerParams(
            dimension_semantics=("parallel",),
            vmem_limit_bytes=vmem_limit),
        cost_estimate=cost,
    )(ilen, txt_embs, img_embs, tlen)

    loss_kernel = functools.partial(_loss_kernel, bs=bs, margin=float(margin),
                                    min_val=float(min_val))
    loss = pl.pallas_call(
        loss_kernel,
        out_shape=jax.ShapeDtypeStruct((1, 1), jnp.float32),
        in_specs=[pl.BlockSpec(memory_space=pltpu.MemorySpace.VMEM)],
        out_specs=pl.BlockSpec(memory_space=pltpu.MemorySpace.VMEM),
    )(scores_t.reshape(bs, bs))

    # TODO(synk): for very large bs, add a second grid axis over the text batch
    # so the resident text block stays within the per-core VMEM budget.
    return loss[0, 0], sim


# ----------------------------------------------------------------------------
# Pure-JAX reference (verification only)
# ----------------------------------------------------------------------------
def _reference(img_embs, txt_embs, img_lens, txt_lens, margin, min_val=1e-8):
    bs, il, _ = img_embs.shape
    _, tl, _ = txt_embs.shape

    def l2n(x):
        n = jnp.sqrt(jnp.sum(x * x, axis=-1, keepdims=True))
        return x / jnp.maximum(n, 1e-12)

    tn, im = l2n(txt_embs), l2n(img_embs)
    s = jnp.einsum('itd,jkd->ijtk', tn, im, precision=jax.lax.Precision.HIGHEST)
    tmask = jnp.arange(tl)[None, :] >= txt_lens[:, None]
    imask = jnp.arange(il)[None, :] >= img_lens[:, None]
    mask = tmask[:, None, :, None] | imask[None, :, None, :]
    s = jnp.where(mask, -jnp.inf, s)
    e = jnp.exp(s)
    denom = e.sum(axis=-2, keepdims=True)
    p = e / (denom + min_val)
    vals = p.max(axis=-2)
    scores = vals.sum(-1)
    eye = jnp.eye(bs, dtype=bool)
    diag = jnp.diagonal(scores)
    lt = jnp.maximum(margin + scores - diag[:, None], min_val)
    li = jnp.maximum(margin + scores - diag[None, :], min_val)
    lt = jnp.where(eye, 0.0, lt)
    li = jnp.where(eye, 0.0, li)
    loss = (lt.mean(axis=1) + li.mean(axis=0)).mean()
    return loss, p


if __name__ == "__main__":
    key = jax.random.PRNGKey(0)
    bs, tl, il, D = 4, 8, 6, 32      # small shapes consistent with the forward
    margin = 0.2                     # opt.struct_loss_margin

    k1, k2, k3, k4 = jax.random.split(key, 4)
    img_embs = jax.random.normal(k1, (bs, il, D), dtype=jnp.float32)
    txt_embs = jax.random.normal(k2, (bs, tl, D), dtype=jnp.float32)
    img_lens = jax.random.randint(k3, (bs,), 1, il + 1)
    txt_lens = jax.random.randint(k4, (bs,), 1, tl + 1)

    loss, sim = multi_object_contrastive_max_loss(
        img_embs, txt_embs, img_lens, txt_lens, margin=margin)
    jax.block_until_ready((loss, sim))

    ref_loss, ref_sim = _reference(img_embs, txt_embs, img_lens, txt_lens, margin)
    assert sim.shape == (bs, bs, tl, il)
    assert jnp.allclose(sim, ref_sim, atol=2e-2), "sim_scores2 mismatch"
    assert jnp.allclose(loss, ref_loss, atol=5e-2), "loss mismatch"

    print("KERNEL_OK")
</pallas_src>

<mosaic_0001>
module attributes {stable_mosaic.version = 11 : i64} {
  func.func @_sim_kernel(%arg0: i32, %arg1: memref<4xi32, #tpu.memory_space<smem>>, %arg2: memref<4x8x128xf32, #tpu.memory_space<vmem>>, %arg3: memref<1x6x128xf32, #tpu.memory_space<vmem>>, %arg4: memref<4x1xi32, #tpu.memory_space<vmem>>, %arg5: memref<4x1x8x6xf32, #tpu.memory_space<vmem>>, %arg6: memref<1x4x1xf32, #tpu.memory_space<vmem>>) attributes {dimension_semantics = [#tpu.dimension_semantics<parallel>], iteration_bounds = array<i64: 4>, scalar_prefetch = 1 : i64, scratch_operands = 0 : i64, tpu.core_type = #tpu.core_type<tc>, window_params = [{pipeline_mode = #tpu.pipeline_mode<synchronous>, transform_indices = @transform_0, window_bounds = array<i64: 4, 8, 128>}, {transform_indices = @transform_1, window_bounds = array<i64: 1, 6, 128>}, {pipeline_mode = #tpu.pipeline_mode<synchronous>, transform_indices = @transform_2, window_bounds = array<i64: 4, 1>}, {transform_indices = @transform_3, window_bounds = array<i64: 4, 1, 8, 6>}, {transform_indices = @transform_4, window_bounds = array<i64: 1, 4, 1>}]} {
    %c0 = arith.constant 0 : index
    %c0_0 = arith.constant 0 : index
    %c0_1 = arith.constant 0 : index
    %0 = vector.load %arg2[%c0, %c0_0, %c0_1] : memref<4x8x128xf32, #tpu.memory_space<vmem>>, vector<4x8x128xf32>
    %c0_2 = arith.constant 0 : index
    %c0_3 = arith.constant 0 : index
    %c0_4 = arith.constant 0 : index
    %1 = vector.load %arg3[%c0_2, %c0_3, %c0_4] : memref<1x6x128xf32, #tpu.memory_space<vmem>>, vector<1x6x128xf32>
    %2 = vector.shape_cast %1 : vector<1x6x128xf32> to vector<6x128xf32>
    %3 = arith.mulf %0, %0 : vector<4x8x128xf32>
    %cst = arith.constant dense<0.000000e+00> : vector<4x8xf32>
    %4 = vector.multi_reduction <add>, %3, %cst [2] : vector<4x8x128xf32> to vector<4x8xf32>
    %5 = vector.shape_cast %4 : vector<4x8xf32> to vector<4x8x1xf32>
    %6 = math.rsqrt %5 : vector<4x8x1xf32>
    %cst_5 = arith.constant 9.99999995E+11 : f32
    %7 = vector.broadcast %cst_5 : f32 to vector<4x8x1xf32>
    %8 = arith.minimumf %6, %7 : vector<4x8x1xf32>
    %9 = arith.mulf %2, %2 : vector<6x128xf32>
    %cst_6 = arith.constant dense<0.000000e+00> : vector<6xf32>
    %10 = vector.multi_reduction <add>, %9, %cst_6 [1] : vector<6x128xf32> to vector<6xf32>
    %11 = vector.shape_cast %10 : vector<6xf32> to vector<6x1xf32>
    %12 = math.rsqrt %11 : vector<6x1xf32>
    %cst_7 = arith.constant 9.99999995E+11 : f32
    %13 = vector.broadcast %cst_7 : f32 to vector<6x1xf32>
    %14 = arith.minimumf %12, %13 : vector<6x1xf32>
    %15 = vector.broadcast %8 : vector<4x8x1xf32> to vector<4x8x128xf32>
    %16 = arith.mulf %0, %15 : vector<4x8x128xf32>
    %17 = vector.broadcast %14 : vector<6x1xf32> to vector<6x128xf32>
    %18 = arith.mulf %2, %17 : vector<6x128xf32>
    %19 = vector.shape_cast %16 : vector<4x8x128xf32> to vector<32x128xf32>
    %cst_8 = arith.constant dense<0.000000e+00> : vector<32x6xf32>
    %20 = tpu.matmul %19, %18, %cst_8 {dimension_numbers = #tpu.dot_dimension_numbers<[1], [1], [0], [0], [0, 0, 1, 0], [], []>} : vector<32x128xf32>, vector<6x128xf32>, vector<32x6xf32> -> vector<32x6xf32>
    %21 = vector.shape_cast %20 : vector<32x6xf32> to vector<4x8x6xf32>
    %22 = tpu.iota {dimensions = array<i32: 1>} : vector<1x8x1xi32>
    %23 = tpu.iota {dimensions = array<i32: 2>} : vector<1x1x6xi32>
    %c0_9 = arith.constant 0 : index
    %c0_10 = arith.constant 0 : index
    %24 = vector.load %arg4[%c0_9, %c0_10] : memref<4x1xi32, #tpu.memory_space<vmem>>, vector<4x1xi32>
    %25 = vector.shape_cast %24 : vector<4x1xi32> to vector<4x1x1xi32>
    %26 = vector.broadcast %22 : vector<1x8x1xi32> to vector<4x8x1xi32>
    %27 = vector.broadcast %25 : vector<4x1x1xi32> to vector<4x8x1xi32>
    %28 = arith.cmpi sge, %26, %27 : vector<4x8x1xi32>
    %29 = arith.index_cast %arg0 : i32 to index
    %30 = memref.load %arg1[%29] : memref<4xi32, #tpu.memory_space<smem>>
    %31 = vector.broadcast %30 : i32 to vector<1x1x6xi32>
    %32 = arith.cmpi sge, %23, %31 : vector<1x1x6xi32>
    %33 = math.exp %21 : vector<4x8x6xf32>
    %cst_11 = arith.constant 0.000000e+00 : f32
    %34 = vector.shape_cast %28 : vector<4x8x1xi1> to vector<4x8x1xi1>
    %35 = vector.broadcast %34 : vector<4x8x1xi1> to vector<4x8x6xi1>
    %36 = vector.broadcast %cst_11 : f32 to vector<4x8x6xf32>
    %37 = arith.select %35, %36, %33 : vector<4x8x6xi1>, vector<4x8x6xf32>
    %cst_12 = arith.constant 0.000000e+00 : f32
    %38 = vector.shape_cast %32 : vector<1x1x6xi1> to vector<1x1x6xi1>
    %39 = vector.broadcast %38 : vector<1x1x6xi1> to vector<4x8x6xi1>
    %40 = vector.broadcast %cst_12 : f32 to vector<4x8x6xf32>
    %41 = arith.select %39, %40, %37 : vector<4x8x6xi1>, vector<4x8x6xf32>
    %cst_13 = arith.constant dense<0.000000e+00> : vector<4x6xf32>
    %42 = vector.multi_reduction <add>, %41, %cst_13 [1] : vector<4x8x6xf32> to vector<4x6xf32>
    %43 = vector.shape_cast %42 : vector<4x6xf32> to vector<4x1x6xf32>
    %cst_14 = arith.constant 9.99999993E-9 : f32
    %44 = vector.broadcast %cst_14 : f32 to vector<4x1x6xf32>
    %45 = arith.addf %43, %44 : vector<4x1x6xf32>
    %46 = tpu.reciprocal %45 {approx = true} : vector<4x1x6xf32> -> vector<4x1x6xf32>
    %47 = vector.broadcast %46 : vector<4x1x6xf32> to vector<4x8x6xf32>
    %48 = arith.mulf %41, %47 : vector<4x8x6xf32>
    %c0_15 = arith.constant 0 : index
    %c0_16 = arith.constant 0 : index
    %c0_17 = arith.constant 0 : index
    %c0_18 = arith.constant 0 : index
    %49 = vector.load %arg5[%c0_15, %c0_16, %c0_17, %c0_18] : memref<4x1x8x6xf32, #tpu.memory_space<vmem>>, vector<4x1x8x6xf32>
    %50 = vector.shape_cast %49 : vector<4x1x8x6xf32> to vector<4x8x6xf32>
    %51 = vector.shape_cast %48 : vector<4x8x6xf32> to vector<4x1x8x6xf32>
    tpu.vector_store %arg5[%c0_15, %c0_16, %c0_17, %c0_18], %51 {strides = array<i32>} : memref<4x1x8x6xf32, #tpu.memory_space<vmem>>, vector<4x1x8x6xf32>,
    %cst_19 = arith.constant dense<0xFF800000> : vector<4x6xf32>
    %52 = vector.multi_reduction <maximumf>, %48, %cst_19 [1] : vector<4x8x6xf32> to vector<4x6xf32>
    %cst_20 = arith.constant dense<0.000000e+00> : vector<4xf32>
    %53 = vector.multi_reduction <add>, %52, %cst_20 [1] : vector<4x6xf32> to vector<4xf32>
    %54 = vector.shape_cast %53 : vector<4xf32> to vector<4x1xf32>
    %c0_21 = arith.constant 0 : index
    %c0_22 = arith.constant 0 : index
    %c0_23 = arith.constant 0 : index
    %55 = vector.load %arg6[%c0_21, %c0_22, %c0_23] : memref<1x4x1xf32, #tpu.memory_space<vmem>>, vector<1x4x1xf32>
    %56 = vector.shape_cast %55 : vector<1x4x1xf32> to vector<4x1xf32>
    %57 = vector.shape_cast %54 : vector<4x1xf32> to vector<1x4x1xf32>
    tpu.vector_store %arg6[%c0_21, %c0_22, %c0_23], %57 {strides = array<i32>} : memref<1x4x1xf32, #tpu.memory_space<vmem>>, vector<1x4x1xf32>,
    return
  }
  func.func @transform_0(%arg0: i32, %arg1: memref<4xi32, #tpu.memory_space<smem>>) -> (i32, i32, i32) {
    %c0_i32 = arith.constant 0 : i32
    %c0_i32_0 = arith.constant 0 : i32
    %c0_i32_1 = arith.constant 0 : i32
    %c0_i32_2 = arith.constant 0 : i32
    return %c0_i32, %c0_i32_0, %c0_i32_1 : i32, i32, i32
  }
  func.func @transform_1(%arg0: i32, %arg1: memref<4xi32, #tpu.memory_space<smem>>) -> (i32, i32, i32) {
    %c0_i32 = arith.constant 0 : i32
    %c0_i32_0 = arith.constant 0 : i32
    %c0_i32_1 = arith.constant 0 : i32
    return %arg0, %c0_i32, %c0_i32_0 : i32, i32, i32
  }
  func.func @transform_2(%arg0: i32, %arg1: memref<4xi32, #tpu.memory_space<smem>>) -> (i32, i32) {
    %c0_i32 = arith.constant 0 : i32
    %c0_i32_0 = arith.constant 0 : i32
    %c0_i32_1 = arith.constant 0 : i32
    return %c0_i32, %c0_i32_0 : i32, i32
  }
  func.func @transform_3(%arg0: i32, %arg1: memref<4xi32, #tpu.memory_space<smem>>) -> (i32, i32, i32, i32) {
    %c0_i32 = arith.constant 0 : i32
    %c0_i32_0 = arith.constant 0 : i32
    %c0_i32_1 = arith.constant 0 : i32
    %c0_i32_2 = arith.constant 0 : i32
    return %c0_i32, %arg0, %c0_i32_0, %c0_i32_1 : i32, i32, i32, i32
  }
  func.func @transform_4(%arg0: i32, %arg1: memref<4xi32, #tpu.memory_space<smem>>) -> (i32, i32, i32) {
    %c0_i32 = arith.constant 0 : i32
    %c0_i32_0 = arith.constant 0 : i32
    %c0_i32_1 = arith.constant 0 : i32
    return %arg0, %c0_i32, %c0_i32_0 : i32, i32, i32
  }
}

</mosaic_0001>

<llo_original>
// kernel: tpu_custom_call.1
$region0: #{tpu_custom_call.1}
  #allocation0 [shape = 'u32[]', space=smem, size = 0x4, offset = 0x4, fixed_abs, tag = 'smem constant byte address 0x4 - core index']
  #allocation1 [shape = 'u32[144,128]{1,0:T(1,128)}', space=vmem, size = 0x12000, scoped, tag = 'internal scratch']
  #allocation2 [shape = 's32[1]{0}', space=sflag, size = 0x4, scoped, tag = 'scoped memory for tpu_custom_call.1']
  #allocation3 [shape = 'u8[512]{0}', space=smem, size = 0x200, scoped, tag = 'prefetched SMEM operand 0']
  %s0 = inlined_call_operand.vmem [shape: s32[4], index: 0, kind: input, shape index: {}]
  %s1 = inlined_call_operand.vmem [shape: f32[4,8,128], index: 1, kind: input, shape index: {}]
  %s2 = inlined_call_operand.vmem [shape: f32[4,6,128], index: 2, kind: input, shape index: {}]
  %s3 = inlined_call_operand.vmem [shape: s32[4,1], index: 3, kind: input, shape index: {}]
  %s4 = inlined_call_operand.vmem [shape: f32[4,4,8,6], index: 4, kind: output, shape index: {0}]
  %s5 = inlined_call_operand.vmem [shape: f32[4,4,1], index: 5, kind: output, shape index: {1}]
  %6 = xla_tuple %s4, %s5
  %s7 = sld [smem:[#allocation0]]
  $region87: #{tpu_custom_call.1} parent=0
    _
  %s9 = ssub.s32 1, %s7
  %s10 = scalar_select 0, %s9, %s7
  %s11 = sshll.u32 %s0, 4
  %s12 = int_to_ptr.vmem [resolvable:$true] %s11
  %14 = dma.vmem_to_smem %s12, 16, [#allocation3], [#allocation2]
  %15 = dma.done [#allocation2], 16
  %16 = sfence
  $region1: #{tpu_custom_call.1} parent=0
    #allocation4 [shape = 'u8[32768]{0}', space=vmem, size = 0x8000, scoped, tag = 'output window, operand 0']
    loop: start=0, step=1, limit=6
    $region2: #{tpu_custom_call.1} parent=1 // loop_pre_header
      _
    $region3: #{tpu_custom_call.1} parent=1 // loop_header
      %s18 = sphi 0, %s22
      %p19 = scmp.ge.s32.totalorder %s18, 6
      %s26 = sphi 0, %s26
      %s28 = sphi 0, %s26
      %s29 = sphi 0, %s28
      %s43 = sphi 0, %s29
      %s49 = sphi 0, %s51
      %s52 = sphi 0, %s49
      %s53 = sphi 0, %s52
      %s69 = sphi 0, %s53
      %s73 = sphi 0, %s73
      %s75 = sphi 0, %s73
      %s76 = sphi 0, %s75
      %s90 = sphi 0, %s76
      %s96 = sphi 0, %s98
      %s99 = sphi 0, %s96
      %s100 = sphi 0, %s99
      %s116 = sphi 0, %s100
      %s122 = sphi 0, %s124
      %s125 = sphi 0, %s122
      %s126 = sphi 0, %s125
      %s142 = sphi 0, %s126
    $region4: #{tpu_custom_call.1} parent=1 // loop_header_branch
      %21 = sbr.rel (%p19) target = $region8
    $region5: #{tpu_custom_call.1} parent=1 // loop_body
      %s23 = ssub.s32 %s18, 1
      %s24 = ssub.s32 %s18, 2
      %s25 = sadd.s32 %s18, 1
      %s27 = sadd.s32 %s26, 1
      %p30 = scmp.eq.s32.totalorder %s18, 3
      %p31 = scmp.ne.s32.totalorder %s26, %s28
      %p32 = scmp.eq.s32.totalorder %s18, 0
      %p33 = por %p31, %p32
      %p34 = scmp.ne.s32.totalorder %s26, %s28
      %p35 = scmp.eq.s32.totalorder %s23, 3
      %p36 = por %p34, %p35
      %p37 = scmp.ne.s32.totalorder %s28, %s29
      %p38 = scmp.eq.s32.totalorder %s23, 0
      %p39 = por %p37, %p38
      %p40 = scmp.ne.s32.totalorder %s28, %s29
      %p41 = scmp.eq.s32.totalorder %s24, 3
      %p42 = por %p40, %p41
      %p44 = scmp.ne.s32.totalorder %s29, %s43
      %p45 = scmp.eq.s32.totalorder %s24, 0
      %p46 = por %p44, %p45
      %s47 = ssub.s32 %s18, %s25
      %p48 = scmp.eq.s32.totalorder %s47, 0
      %s50 = sadd.s32 %s49, 1
      %s51 = scalar_select %p48, %s49, %s50
      %p54 = pneg %p48
      %p55 = scmp.eq.s32.totalorder %s18, 3
      %p56 = por %p54, %p55
      %p57 = scmp.ne.s32.totalorder %s49, %s52
      %p58 = scmp.eq.s32.totalorder %s18, 0
      %p59 = por %p57, %p58
      %p60 = scmp.ne.s32.totalorder %s49, %s52
      %p61 = scmp.eq.s32.totalorder %s23, 3
      %p62 = por %p60, %p61
      %p63 = scmp.ne.s32.totalorder %s52, %s53
      %p64 = scmp.eq.s32.totalorder %s23, 0
      %p65 = por %p63, %p64
      %p66 = scmp.ne.s32.totalorder %s52, %s53
      %p67 = scmp.eq.s32.totalorder %s24, 3
      %p68 = por %p66, %p67
      %p70 = scmp.ne.s32.totalorder %s53, %s69
      %p71 = scmp.eq.s32.totalorder %s24, 0
      %p72 = por %p70, %p71
      %s74 = sadd.s32 %s73, 1
      %p77 = scmp.eq.s32.totalorder %s18, 3
      %p78 = scmp.ne.s32.totalorder %s73, %s75
      %p79 = scmp.eq.s32.totalorder %s18, 0
      %p80 = por %p78, %p79
      %p81 = scmp.ne.s32.totalorder %s73, %s75
      %p82 = scmp.eq.s32.totalorder %s23, 3
      %p83 = por %p81, %p82
      %p84 = scmp.ne.s32.totalorder %s75, %s76
      %p85 = scmp.eq.s32.totalorder %s23, 0
      %p86 = por %p84, %p85
      %p87 = scmp.ne.s32.totalorder %s75, %s76
      %p88 = scmp.eq.s32.totalorder %s24, 3
      %p89 = por %p87, %p88
      %p91 = scmp.ne.s32.totalorder %s76, %s90
      %p92 = scmp.eq.s32.totalorder %s24, 0
      %p93 = por %p91, %p92
      %s94 = ssub.s32 %s18, %s25
      %p95 = scmp.eq.s32.totalorder %s94, 0
      %s97 = sadd.s32 %s96, 1
      %s98 = scalar_select %p95, %s96, %s97
      %p101 = pneg %p95
      %p102 = scmp.eq.s32.totalorder %s18, 3
      %p103 = por %p101, %p102
      %p104 = scmp.ne.s32.totalorder %s96, %s99
      %p105 = scmp.eq.s32.totalorder %s18, 0
      %p106 = por %p104, %p105
      %p107 = scmp.ne.s32.totalorder %s96, %s99
      %p108 = scmp.eq.s32.totalorder %s23, 3
      %p109 = por %p107, %p108
      %p110 = scmp.ne.s32.totalorder %s99, %s100
      %p111 = scmp.eq.s32.totalorder %s23, 0
      %p112 = por %p110, %p111
      %p113 = scmp.ne.s32.totalorder %s99, %s100
      %p114 = scmp.eq.s32.totalorder %s24, 3
      %p115 = por %p113, %p114
      %p117 = scmp.ne.s32.totalorder %s100, %s116
      %p118 = scmp.eq.s32.totalorder %s24, 0
      %p119 = por %p117, %p118
      %s120 = ssub.s32 %s18, %s25
      %p121 = scmp.eq.s32.totalorder %s120, 0
      %s123 = sadd.s32 %s122, 1
      %s124 = scalar_select %p121, %s122, %s123
      %p127 = pneg %p121
      %p128 = scmp.eq.s32.totalorder %s18, 3
      %p129 = por %p127, %p128
      %p130 = scmp.ne.s32.totalorder %s122, %s125
      %p131 = scmp.eq.s32.totalorder %s18, 0
      %p132 = por %p130, %p131
      %p133 = scmp.ne.s32.totalorder %s122, %s125
      %p134 = scmp.eq.s32.totalorder %s23, 3
      %p135 = por %p133, %p134
      %p136 = scmp.ne.s32.totalorder %s125, %s126
      %p137 = scmp.eq.s32.totalorder %s23, 0
      %p138 = por %p136, %p137
      %p139 = scmp.ne.s32.totalorder %s125, %s126
      %p140 = scmp.eq.s32.totalorder %s24, 3
      %p141 = por %p139, %p140
      %p143 = scmp.ne.s32.totalorder %s126, %s142
      %p144 = scmp.eq.s32.totalorder %s24, 0
      %p145 = por %p143, %p144
      %p146 = scmp.le.s32.totalorder 1, %s18
      %p147 = scmp.lt.s32.totalorder %s18, 5
      %p148 = pnand %p146, %p147
      %p149 = pneg %p148
      // Predicated region
      $region9: #{tpu_custom_call.1} parent=5 // pred_check
        _
      $region10: #{tpu_custom_call.1} parent=5 // pred_check_branch
        %151 = sbr.rel (%p148) target = $region12
      $region11: #{tpu_custom_call.1} parent=5 // pred_region
        %s152 = ssub.s32 %s18, 1
        // Predicated region
        $region13: #{tpu_custom_call.1} parent=11 // pred_check
          %p153 = pneg %p39
        $region14: #{tpu_custom_call.1} parent=11 // pred_check_branch
          %155 = sbr.rel (%p153) target = $region16
        $region15: #{tpu_custom_call.1} parent=11 // pred_region
          _
        $region16: #{tpu_custom_call.1} parent=11 // pred_fallthru
          _
        // Predicated region
        $region17: #{tpu_custom_call.1} parent=11 // pred_check
          %p156 = pneg %p86
        $region18: #{tpu_custom_call.1} parent=11 // pred_check_branch
          %158 = sbr.rel (%p156) target = $region20
        $region19: #{tpu_custom_call.1} parent=11 // pred_region
          _
        $region20: #{tpu_custom_call.1} parent=11 // pred_fallthru
          _
      $region12: #{tpu_custom_call.1} parent=5 // pred_fallthru
        _
      %p159 = scmp.lt.s32.totalorder %s18, 4
      // Predicated region
      $region21: #{tpu_custom_call.1} parent=5 // pred_check
        %p160 = pneg %p159
      $region22: #{tpu_custom_call.1} parent=5 // pred_check_branch
        %162 = sbr.rel (%p160) target = $region24
      $region23: #{tpu_custom_call.1} parent=5 // pred_region
        // Predicated region
        $region25: #{tpu_custom_call.1} parent=23 // pred_check
          %p163 = pneg %p59
        $region26: #{tpu_custom_call.1} parent=23 // pred_check_branch
          %165 = sbr.rel (%p163) target = $region28
        $region27: #{tpu_custom_call.1} parent=23 // pred_region
          %p166 = scmp.lt.s32.totalorder %s18, 3
          %s167 = scalar_select %p166, %s18, 3
          %s168 = smul.addr %s167, 8
          %s169 = scalar_lea.vmem %s2, %s168
        $region28: #{tpu_custom_call.1} parent=23 // pred_fallthru
          _
      $region24: #{tpu_custom_call.1} parent=5 // pred_fallthru
        _
      %p170 = scmp.le.s32.totalorder 1, %s18
      %p171 = scmp.lt.s32.totalorder %s18, 5
      %p172 = pnand %p170, %p171
      %p173 = pneg %p172
      // Predicated region
      $region29: #{tpu_custom_call.1} parent=5 // pred_check
        _
      $region30: #{tpu_custom_call.1} parent=5 // pred_check_branch
        %175 = sbr.rel (%p172) target = $region32
      $region31: #{tpu_custom_call.1} parent=5 // pred_region
        %s176 = ssub.s32 %s18, 1
        %p177 = pneg %p39
        %p178 = pneg %p36
        %p179 = scmp.lt.s32.totalorder %s23, 3
        %s180 = scalar_select %p179, %s23, 3
        %s181 = smul.addr %s180, 8
        %s182 = scalar_lea.vmem %s2, %s181
        %p183 = pneg %p65
        %p184 = pneg %p62
        %p185 = pneg %p86
        %p186 = pneg %p83
        %p187 = pneg %p112
        %p188 = pneg %p109
        %s189 = sand.u32 %s99, 1
        %s190 = sand.u32 %s99, 1
        %s191 = smul.addr %s190, 32
        %s192 = scalar_lea.vmem [#allocation4], %s191
        %p193 = pneg %p138
        %p194 = pneg %p135
        %p195 = scmp.lt.s32.totalorder %s23, 3
        %s196 = scalar_select %p195, %s23, 3
        %s197 = smul.addr %s196, 4
        %s198 = scalar_lea.vmem %s5, %s197
        %p199 = scmp.lt.s32.totalorder %s23, 3
        %s200 = scalar_select %p199, %s23, 3
        %s201 = smul.addr %s200, 8
        %s202 = scalar_lea.vmem %s2, %s201
        %p203 = scmp.lt.s32.totalorder %s23, 3
        %s204 = scalar_select %p203, %s23, 3
        %s205 = smul.addr %s204, 4
        %s206 = scalar_lea.vmem %s5, %s205
        %v207 = vld [vmem:[%s1] sm:$0xff]
        %v208 = vld [vmem:[%s1 + $0x8] sm:$0xff]
        %v209 = vld [vmem:[%s1 + $0x10] sm:$0xff]
        %v210 = vld [vmem:[%s1 + $0x18] sm:$0xff]
        %v211 = vld [vmem:[%s202] sm:$0x3f]
        %v212 = vmul.f32 %v207, %v207
        %v213 = vmul.f32 %v208, %v208
        %v214 = vmul.f32 %v209, %v209
        %v215 = vmul.f32 %v210, %v210
        %216 = vadd.xlane.f32.xlu0 %v212
        %v217 = vpop.xlane.xlu0 %216
        %218 = vadd.xlane.f32.xlu0 %v213
        %v219 = vpop.xlane.xlu0 %218
        %220 = vadd.xlane.f32.xlu0 %v214
        %v221 = vpop.xlane.xlu0 %220
        %222 = vadd.xlane.f32.xlu0 %v215
        %v223 = vpop.xlane.xlu0 %222
        %v224 = vrsqrt.pop %v217
        %v225 = vrsqrt.pop %v219
        %v226 = vrsqrt.pop %v221
        %v227 = vrsqrt.pop %v223
        %v228 = vmin.f32 %v224, 1e+12
        %v229 = vmin.f32 %v225, 1e+12
        %v230 = vmin.f32 %v226, 1e+12
        %v231 = vmin.f32 %v227, 1e+12
        %v232 = vmul.f32 %v211, %v211
        %vm233 = vcmask 1045504
        %v234 = vsel %vm233, %v232, 0.0
        %235 = vadd.xlane.f32.xlu0 %v234
        %v236 = vpop.xlane.xlu0 %235
        %v237 = vrsqrt.pop %v236
        %v238 = vmin.f32 %v237, 1e+12
        %v239 = vmul.f32 %v207, %v228
        %v240 = vmul.f32 %v208, %v229
        %v241 = vmul.f32 %v209, %v230
        %v242 = vmul.f32 %v210, %v231
        %v243 = vmul.f32 %v211, %v238
        %244 = vmatprep.subr.mxu0 0.0
        %245 = vmatpush1.xpose.msra.mxu0 0.0
        %246 = vmatprep.subr.mxu0 0.0
        %247 = vmatpush1.xpose.msra.mxu0 0.0
        %248 = vmatprep.subr.mxu0 0.0
        %249 = vmatpush1.xpose.msra.mxu0 0.0
        %250 = vmatprep.subr.mxu0 0.0
        %251 = vmatpush1.xpose.msra.mxu0 0.0
        %252 = vmatprep.subr.mxu0 0.0
        %253 = vmatpush1.xpose.msra.mxu0 0.0
        %254 = vmatprep.subr.mxu0 0.0
        %255 = vmatpush1.xpose.msra.mxu0 0.0
        %256 = vmatprep.subr.mxu0 0.0
        %257 = vmatpush1.xpose.msra.mxu0 0.0
        %258 = vmatprep.subr.mxu0 0.0
        %259 = vmatpush1.xpose.msra.mxu0 0.0
        %260 = vmatprep.subr.mxu0 0.0
        %261 = vmatpush1.xpose.msra.mxu0 0.0
        %262 = vmatprep.subr.mxu0 0.0
        %263 = vmatpush1.xpose.msra.mxu0 0.0
        %264 = vmatprep.subr.mxu0 0.0
        %265 = vmatpush1.xpose.msra.mxu0 0.0
        %266 = vmatprep.subr.mxu0 0.0
        %267 = vmatpush1.xpose.msra.mxu0 0.0
        %268 = vmatprep.subr.mxu0 0.0
        %269 = vmatpush1.xpose.msra.mxu0 0.0
        %270 = vmatprep.subr.mxu0 0.0
        %271 = vmatpush1.xpose.msra.mxu0 0.0
        %272 = vmatprep.subr.mxu0 0.0
        %273 = vmatpush1.xpose.msra.mxu0 0.0
        %274 = vmatprep.subr.mxu0 0.0
        %275 = vmatpush1.xpose.msra.mxu0 %v243
        %276 = vmatprep.subr.mxu0 0.0
        %277 = vmatpush2.xpose.msra.mxu0 0.0
        %278 = vmatprep.subr.mxu0 0.0
        %279 = vmatpush2.xpose.msra.mxu0 0.0
        %280 = vmatprep.subr.mxu0 0.0
        %281 = vmatpush2.xpose.msra.mxu0 0.0
        %282 = vmatprep.subr.mxu0 0.0
        %283 = vmatpush2.xpose.msra.mxu0 0.0
        %284 = vmatprep.subr.mxu0 0.0
        %285 = vmatpush2.xpose.msra.mxu0 0.0
        %286 = vmatprep.subr.mxu0 0.0
        %287 = vmatpush2.xpose.msra.mxu0 0.0
        %288 = vmatprep.subr.mxu0 0.0
        %289 = vmatpush2.xpose.msra.mxu0 0.0
        %290 = vmatprep.subr.mxu0 0.0
        %291 = vmatpush2.xpose.msra.mxu0 0.0
        %292 = vmatprep.subr.mxu0 0.0
        %293 = vmatpush2.xpose.msra.mxu0 0.0
        %294 = vmatprep.subr.mxu0 0.0
        %295 = vmatpush2.xpose.msra.mxu0 0.0
        %296 = vmatprep.subr.mxu0 0.0
        %297 = vmatpush2.xpose.msra.mxu0 0.0
        %298 = vmatprep.subr.mxu0 0.0
        %299 = vmatpush2.xpose.msra.mxu0 0.0
        %300 = vmatprep.subr.mxu0 0.0
        %301 = vmatpush2.xpose.msra.mxu0 0.0
        %302 = vmatprep.subr.mxu0 0.0
        %303 = vmatpush2.xpose.msra.mxu0 0.0
        %304 = vmatprep.subr.mxu0 0.0
        %305 = vmatpush2.xpose.msra.mxu0 0.0
        %306 = vmatprep.subr.mxu0 0.0
        %307 = vmatpush2.xpose.msra.mxu0 0.0
        %308 = vmatprep.mubr.f32.mxu0 0.0
        %309 = vmatmul.mubr.f32.gmra.mxu0 %v239
        %v310 = vpop.f32.mrf.mxu0
        %v311 = vadd.f32 0.0, %v310
        %v312 = vpop.f32.mrf.mxu0
        %313 = vmatprep.mubr.f32.mxu0 0.0
        %314 = vmatmul.mubr.f32.gmra.mxu0 %v240
        %v315 = vpop.f32.mrf.mxu0
        %v316 = vadd.f32 0.0, %v315
        %v317 = vpop.f32.mrf.mxu0
        %318 = vmatprep.mubr.f32.mxu0 0.0
        %319 = vmatmul.mubr.f32.gmra.mxu0 %v241
        %v320 = vpop.f32.mrf.mxu0
        %v321 = vadd.f32 0.0, %v320
        %v322 = vpop.f32.mrf.mxu0
        %323 = vmatprep.mubr.f32.mxu0 0.0
        %324 = vmatmul.mubr.f32.gmra.mxu0 %v242
        %v325 = vpop.f32.mrf.mxu0
        %v326 = vadd.f32 0.0, %v325
        %v327 = vpop.f32.mrf.mxu0
        %328 = vdwg.mxu0
        %v329 = vlaneseq
        %v330 = vshrl.u32 %v329, 7
        %v331 = vlaneseq
        %v332 = vand.u32 %v331, 127
        %v333 = vld [vmem:[%s3] sm:$0xf]
        %v335 = vunpack.c.l.s4 1966171168
        %v336 = vunpack.c.0.s8 %v335
        %v337 = vlaneseq
        %v338 = vshrl.u32 %v337, 7
        %v339 = vsub.s32 %v336, %v338
        %v340 = vrot.slane %v333, %v339
        %v341 = vcombine.high %v340, %v340
        %v343 = vunpack.c.l.s4 1966171168
        %v344 = vunpack.c.0.s8 %v343
        %v345 = vlaneseq
        %v346 = vshrl.u32 %v345, 7
        %v347 = vsub.s32 %v344, %v346
        %v348 = vrot.slane %v340, %v347
        %v350 = vunpack.c.l.s4 1966171168
        %v351 = vunpack.c.0.s8 %v350
        %v352 = vlaneseq
        %v353 = vshrl.u32 %v352, 7
        %v354 = vsub.s32 %v351, %v353
        %v355 = vrot.slane %v341, %v354
        %v356 = vcombine.high %v348, %v348
        %v357 = vcombine.high %v355, %v355
        %v358 = vlaneseq
        %v359 = vshrl.u32 %v358, 7
        %v360 = vsub.s32 0, %v359
        %v361 = vrot.slane %v348, %v360
        %v362 = vlaneseq
        %v363 = vshrl.u32 %v362, 7
        %v364 = vsub.s32 0, %v363
        %v365 = vrot.slane %v355, %v364
        %v366 = vlaneseq
        %v367 = vshrl.u32 %v366, 7
        %v368 = vsub.s32 0, %v367
        %v369 = vrot.slane %v356, %v368
        %v370 = vlaneseq
        %v371 = vshrl.u32 %v370, 7
        %v372 = vsub.s32 0, %v371
        %v373 = vrot.slane %v357, %v372
        %vm374 = vcmp.ge.s32.totalorder %v330, %v361
        %vm375 = vcmp.ge.s32.totalorder %v330, %v365
        %vm376 = vcmp.ge.s32.totalorder %v330, %v369
        %vm377 = vcmp.ge.s32.totalorder %v330, %v373
        %s378 = sld [smem:[#allocation3 + %s23]]
        %v379 = vstv %s378
        %vm380 = vcmp.ge.s32.totalorder %v332, %v379
        %v381 = vmul.f32 %v311, 1.442695
        %v382 = vpow.pop %v381
        %v383 = vmul.f32 %v316, 1.442695
        %v384 = vpow.pop %v383
        %v385 = vmul.f32 %v321, 1.442695
        %v386 = vpow.pop %v385
        %v387 = vmul.f32 %v326, 1.442695
        %v388 = vpow.pop %v387
        %v389 = vsel %vm374, 1, 0
        %v390 = vsel %vm375, 1, 0
        %v391 = vsel %vm376, 1, 0
        %v392 = vsel %vm377, 1, 0
        %393 = vset.pattern.permute.xlu0 0
        %394 = vperm.xlu0 %393, %v389
        %v395 = vpop.permute.xlu0 %394
        %396 = vset.pattern.permute.xlu0 0
        %397 = vperm.xlu0 %396, %v390
        %v398 = vpop.permute.xlu0 %397
        %399 = vset.pattern.permute.xlu0 0
        %400 = vperm.xlu0 %399, %v391
        %v401 = vpop.permute.xlu0 %400
        %402 = vset.pattern.permute.xlu0 0
        %403 = vperm.xlu0 %402, %v392
        %v404 = vpop.permute.xlu0 %403
        %vm405 = vcmp.eq.s32.totalorder %v395, 1
        %vm406 = vcmp.eq.s32.totalorder %v398, 1
        %vm407 = vcmp.eq.s32.totalorder %v401, 1
        %vm408 = vcmp.eq.s32.totalorder %v404, 1
        %v409 = vsel %vm405, 0.0, %v382
        %v410 = vsel %vm406, 0.0, %v384
        %v411 = vsel %vm407, 0.0, %v386
        %v412 = vsel %vm408, 0.0, %v388
        %v413 = vsel %vm380, 1, 0
        %vm414 = vcmp.eq.s32.totalorder %v413, 1
        %v415 = vsel %vm414, 0.0, %v409
        %v416 = vsel %vm414, 0.0, %v410
        %v417 = vsel %vm414, 0.0, %v411
        %v418 = vsel %vm414, 0.0, %v412
        %vm419 = vcmask 48128
        %v420 = vsel %vm419, %v415, 0.0
        %v421 = vrot.slane %v420, 4
        %v422 = vadd.f32 %v420, %v421
        %v423 = vrot.slane %v422, 2
        %v424 = vadd.f32 %v422, %v423
        %v425 = vrot.slane %v424, 1
        %v426 = vadd.f32 %v424, %v425
        %v427 = vsel %vm419, %v416, 0.0
        %v428 = vrot.slane %v427, 4
        %v429 = vadd.f32 %v427, %v428
        %v430 = vrot.slane %v429, 2
        %v431 = vadd.f32 %v429, %v430
        %v432 = vrot.slane %v431, 1
        %v433 = vadd.f32 %v431, %v432
        %v434 = vsel %vm419, %v417, 0.0
        %v435 = vrot.slane %v434, 4
        %v436 = vadd.f32 %v434, %v435
        %v437 = vrot.slane %v436, 2
        %v438 = vadd.f32 %v436, %v437
        %v439 = vrot.slane %v438, 1
        %v440 = vadd.f32 %v438, %v439
        %v441 = vsel %vm419, %v418, 0.0
        %v442 = vrot.slane %v441, 4
        %v443 = vadd.f32 %v441, %v442
        %v444 = vrot.slane %v443, 2
        %v445 = vadd.f32 %v443, %v444
        %v446 = vrot.slane %v445, 1
        %v447 = vadd.f32 %v445, %v446
        %v448 = vadd.f32 %v426, 1e-08
        %v449 = vadd.f32 %v433, 1e-08
        %v450 = vadd.f32 %v440, 1e-08
        %v451 = vadd.f32 %v447, 1e-08
        %v452 = vrcp.pop %v448
        %v453 = vrcp.pop %v449
        %v454 = vrcp.pop %v450
        %v455 = vrcp.pop %v451
        %v456 = vmul.f32 %v415, %v452
        %v457 = vmul.f32 %v416, %v453
        %v458 = vmul.f32 %v417, %v454
        %v459 = vmul.f32 %v418, %v455
        %460 = vst.msk [vmem:[%s192] sm:$0xff] %vm419, %v456
        %461 = vst.msk [vmem:[%s192 + $0x8] sm:$0xff] %vm419, %v457
        %462 = vst.msk [vmem:[%s192 + $0x10] sm:$0xff] %vm419, %v458
        %463 = vst.msk [vmem:[%s192 + $0x18] sm:$0xff] %vm419, %v459
        %v464 = vsel %vm419, %v456, -inf
        %v465 = vrot.slane %v464, 4
        %v466 = vmax.f32 %v464, %v465
        %v467 = vrot.slane %v466, 2
        %v468 = vmax.f32 %v466, %v467
        %v469 = vrot.slane %v468, 1
        %v470 = vmax.f32 %v468, %v469
        %v471 = vsel %vm419, %v457, -inf
        %v472 = vrot.slane %v471, 4
        %v473 = vmax.f32 %v471, %v472
        %v474 = vrot.slane %v473, 2
        %v475 = vmax.f32 %v473, %v474
        %v476 = vrot.slane %v475, 1
        %v477 = vmax.f32 %v475, %v476
        %v478 = vsel %vm419, %v458, -inf
        %v479 = vrot.slane %v478, 4
        %v480 = vmax.f32 %v478, %v479
        %v481 = vrot.slane %v480, 2
        %v482 = vmax.f32 %v480, %v481
        %v483 = vrot.slane %v482, 1
        %v484 = vmax.f32 %v482, %v483
        %v485 = vsel %vm419, %v459, -inf
        %v486 = vrot.slane %v485, 4
        %v487 = vmax.f32 %v485, %v486
        %v488 = vrot.slane %v487, 2
        %v489 = vmax.f32 %v487, %v488
        %v490 = vrot.slane %v489, 1
        %v491 = vmax.f32 %v489, %v490
        %vm496 = vcmask 1041409
        %v497 = vsel %vm496, %v477, %v470
        %vm498 = vcmask 1042434
        %v499 = vsel %vm498, %v484, %v497
        %vm500 = vcmask 1043459
        %v501 = vsel %vm500, %v491, %v499
        %vm503 = vcmask 44032
        %v504 = vsel %vm503, %v501, 0.0
        %505 = vadd.xlane.f32.xlu0 %v504
        %v506 = vpop.xlane.xlu0 %505
        %vm507 = vcmask 3072
        %508 = vst.msk [vmem:[%s206] sm:$0xf] %vm507, %v506
        %s509 = sand.u32 %s99, 1
        %s510 = sand.u32 %s99, 1
        %s511 = smul.addr %s510, 32
        %s512 = scalar_lea.vmem [#allocation4], %s511
        %p513 = scmp.lt.s32.totalorder %s23, 3
        %s514 = scalar_select %p513, %s23, 3
        %s515 = smul.addr %s514, 4
        %s516 = scalar_lea.vmem %s5, %s515
        // Predicated region
        $region33: #{tpu_custom_call.1} parent=31 // pred_check
          %p517 = pneg %p109
        $region34: #{tpu_custom_call.1} parent=31 // pred_check_branch
          %519 = sbr.rel (%p517) target = $region36
        $region35: #{tpu_custom_call.1} parent=31 // pred_region
          %s520 = smul.addr %s23, 8
          %s521 = scalar_lea.vmem %s4, %s520
          // Predicated region
          $region37: #{tpu_custom_call.1} parent=35 // pred_check
            _
          $region38: #{tpu_custom_call.1} parent=35 // pred_check_branch
            %523 = sbr.rel (0) target = $region40
          $region39: #{tpu_custom_call.1} parent=35 // pred_region
            // Predicated region
            $region41: #{tpu_custom_call.1} parent=39 // pred_check
              _
            $region42: #{tpu_custom_call.1} parent=39 // pred_check_branch
              %525 = sbr.rel (0) target = $region44
            $region43: #{tpu_custom_call.1} parent=39 // pred_region
              // Predicated region
              $region56: #{tpu_custom_call.1} parent=43 // pred_check
                _
              $region57: #{tpu_custom_call.1} parent=43 // pred_check_branch
                %547 = sbr.rel (0) target = $region59
              $region58: #{tpu_custom_call.1} parent=43 // pred_region
                loop: start=0, step=1, limit=1
                $region60: #{tpu_custom_call.1} parent=58 // loop_pre_header
                  _
                $region61: #{tpu_custom_call.1} parent=58 // loop_header
                  %s549 = sphi 0, %s553
                  %p550 = scmp.ge.s32.totalorder %s549, 1
                  %s554 = sphi %s512, %s512
                  %s555 = sphi %s521, %s521
                $region62: #{tpu_custom_call.1} parent=58 // loop_header_branch
                  %552 = sbr.rel (%p550) target = $region66
                $region63: #{tpu_custom_call.1} parent=58 // loop_body
                  %v556 = vld [vmem:[%s554] sm:$0xff]
                  %557 = vst [vmem:[%s555] sm:$0xff] %v556
                  %v558 = vld [vmem:[%s554 + $0x8] sm:$0xff]
                  %559 = vst [vmem:[%s555 + $0x20] sm:$0xff] %v558
                  %v560 = vld [vmem:[%s554 + $0x10] sm:$0xff]
                  %561 = vst [vmem:[%s555 + $0x40] sm:$0xff] %v560
                  %v562 = vld [vmem:[%s554 + $0x18] sm:$0xff]
                  %563 = vst [vmem:[%s555 + $0x60] sm:$0xff] %v562
                $region64: #{tpu_custom_call.1} parent=58 // loop_footer
                  %s553 = sadd.s32 1, %s549
                $region65: #{tpu_custom_call.1} parent=58 // loop_footer_branch
                  %548 = sbr.rel target = $region61
                $region66: #{tpu_custom_call.1} parent=58 // loop_exit
                  _
              $region59: #{tpu_custom_call.1} parent=43 // pred_fallthru
                _
              // Predicated region
              $region67: #{tpu_custom_call.1} parent=43 // pred_check
                _
              $region68: #{tpu_custom_call.1} parent=43 // pred_check_branch
                %565 = sbr.rel target = $region70
              $region69: #{tpu_custom_call.1} parent=43 // pred_region
                _
              $region70: #{tpu_custom_call.1} parent=43 // pred_fallthru
                _
            $region44: #{tpu_custom_call.1} parent=39 // pred_fallthru
              _
            // Predicated region
            $region45: #{tpu_custom_call.1} parent=39 // pred_check
              _
            $region46: #{tpu_custom_call.1} parent=39 // pred_check_branch
              %527 = sbr.rel target = $region48
            $region47: #{tpu_custom_call.1} parent=39 // pred_region
              %s529 = ssub.s32 256, 1
              loop: start=0, step=1, limit=1
              $region49: #{tpu_custom_call.1} parent=47 // loop_pre_header
                _
              $region50: #{tpu_custom_call.1} parent=47 // loop_header
                %s531 = sphi 0, %s535
                %p532 = scmp.ge.s32.totalorder %s531, 1
                %s536 = sphi %s512, %s512
                %s537 = sphi %s521, %s521
              $region51: #{tpu_custom_call.1} parent=47 // loop_header_branch
                %534 = sbr.rel (%p532) target = $region55
              $region52: #{tpu_custom_call.1} parent=47 // loop_body
                %v538 = vld [vmem:[%s536] sm:%s529]
                %539 = vst [vmem:[%s537] sm:%s529] %v538
                %v540 = vld [vmem:[%s536 + $0x8] sm:%s529]
                %541 = vst [vmem:[%s537 + $0x20] sm:%s529] %v540
                %v542 = vld [vmem:[%s536 + $0x10] sm:%s529]
                %543 = vst [vmem:[%s537 + $0x40] sm:%s529] %v542
                %v544 = vld [vmem:[%s536 + $0x18] sm:%s529]
                %545 = vst [vmem:[%s537 + $0x60] sm:%s529] %v544
              $region53: #{tpu_custom_call.1} parent=47 // loop_footer
                %s535 = sadd.s32 1, %s531
              $region54: #{tpu_custom_call.1} parent=47 // loop_footer_branch
                %530 = sbr.rel target = $region50
              $region55: #{tpu_custom_call.1} parent=47 // loop_exit
                _
            $region48: #{tpu_custom_call.1} parent=39 // pred_fallthru
              _
          $region40: #{tpu_custom_call.1} parent=35 // pred_fallthru
            _
          %566 = vnop
        $region36: #{tpu_custom_call.1} parent=31 // pred_fallthru
          _
        // Predicated region
        $region71: #{tpu_custom_call.1} parent=31 // pred_check
          %p567 = pneg %p135
        $region72: #{tpu_custom_call.1} parent=31 // pred_check_branch
          %569 = sbr.rel (%p567) target = $region74
        $region73: #{tpu_custom_call.1} parent=31 // pred_region
          _
        $region74: #{tpu_custom_call.1} parent=31 // pred_fallthru
          _
      $region32: #{tpu_custom_call.1} parent=5 // pred_fallthru
        _
      %p570 = scmp.le.s32.totalorder 2, %s18
      // Predicated region
      $region75: #{tpu_custom_call.1} parent=5 // pred_check
        %p571 = pneg %p570
      $region76: #{tpu_custom_call.1} parent=5 // pred_check_branch
        %573 = sbr.rel (%p571) target = $region78
      $region77: #{tpu_custom_call.1} parent=5 // pred_region
        %s574 = ssub.s32 %s18, 2
        // Predicated region
        $region79: #{tpu_custom_call.1} parent=77 // pred_check
          %p575 = pneg %p115
        $region80: #{tpu_custom_call.1} parent=77 // pred_check_branch
          %577 = sbr.rel (%p575) target = $region82
        $region81: #{tpu_custom_call.1} parent=77 // pred_region
          %s578 = sand.u32 %s100, 1
          %s579 = sand.u32 %s100, 1
          %s580 = smul.addr %s579, 32
          %s581 = scalar_lea.vmem [#allocation4], %s580
        $region82: #{tpu_custom_call.1} parent=77 // pred_fallthru
          _
        // Predicated region
        $region83: #{tpu_custom_call.1} parent=77 // pred_check
          %p582 = pneg %p141
        $region84: #{tpu_custom_call.1} parent=77 // pred_check_branch
          %584 = sbr.rel (%p582) target = $region86
        $region85: #{tpu_custom_call.1} parent=77 // pred_region
          %p585 = scmp.lt.s32.totalorder %s24, 3
          %s586 = scalar_select %p585, %s24, 3
          %s587 = smul.addr %s586, 4
          %s588 = scalar_lea.vmem %s5, %s587
        $region86: #{tpu_custom_call.1} parent=77 // pred_fallthru
          _
      $region78: #{tpu_custom_call.1} parent=5 // pred_fallthru
        _
    $region6: #{tpu_custom_call.1} parent=1 // loop_footer
      %s22 = sadd.s32 1, %s18
    $region7: #{tpu_custom_call.1} parent=1 // loop_footer_branch
      %17 = sbr.rel target = $region3
    $region8: #{tpu_custom_call.1} parent=1 // loop_exit
      _

</llo_original>
